<compile_context>
chip_gen: v7x
topology: tpu7x:2x2x1
jax: 0.10.0
libtpu: 0.0.40
codegen_flags: <defaults>
</compile_context>

<pallas_src>
import functools

import jax
import jax.numpy as jnp
from jax.experimental import pallas as pl
from jax.experimental.pallas import tpu as pltpu

NEG_SLOPE = 0.01      # torch.nn.LeakyReLU default negative_slope
BN_EPS = 1e-5         # torch.nn.BatchNorm1d default eps
LANE = 128            # TPU lane width
SUB = 8               # TPU sublane width


def _round_up(a, b):
    return (a + b - 1) // b * b


# ---------------------------------------------------------------------------
# pure-JAX reference helpers (used only for the correctness check)
# ---------------------------------------------------------------------------
def _leaky_relu(x):
    return jnp.where(x > 0, x, NEG_SLOPE * x)


def _conv3_same(h, w_taps):
    """Conv1d(k=3, stride=1, pad=1, no bias), channels-last.  w_taps[k] = W[:, :, k].T"""
    N, L, Cin = h.shape
    Cout = w_taps.shape[-1]
    zeros = jnp.zeros((N, 1, Cin), dtype=h.dtype)
    h_pad = jnp.concatenate([zeros, h, zeros], axis=1)
    acc = jnp.zeros((N * L, Cout), dtype=jnp.float32)
    for k in range(3):
        acc = acc + jnp.dot(h_pad[:, k:k + L, :].reshape(N * L, Cin), w_taps[k],
                            preferred_element_type=jnp.float32)
    return acc.reshape(N, L, Cout)


def _batchnorm_train(y, gamma, beta):
    N, L, C = y.shape
    flat = y.reshape(N * L, C)
    mean = jnp.mean(flat, axis=0, keepdims=True)
    var = jnp.mean((flat - mean) ** 2, axis=0, keepdims=True)      # biased variance
    out = (flat - mean) * jax.lax.rsqrt(var + BN_EPS) * gamma + beta
    return out.reshape(N, L, C)


def resblock1d_ref(x_ncl, w_pre, w1, w2, g1, b1, g2, b2):
    N, Cin, L = x_ncl.shape
    Cout = w1.shape[0]
    x = jnp.transpose(x_ncl, (0, 2, 1)).astype(jnp.float32)
    if w_pre is None:
        h = x
    else:
        h = (x.reshape(N * L, Cin) @ jnp.transpose(w_pre[:, :, 0], (1, 0))
             ).reshape(N, L, Cout)
    y = _conv3_same(h, jnp.transpose(w1, (2, 1, 0)))
    y = _batchnorm_train(y, g1.reshape(1, Cout), b1.reshape(1, Cout))
    y = _leaky_relu(y)
    y = _conv3_same(y, jnp.transpose(w2, (2, 1, 0)))
    y = _batchnorm_train(y, g2.reshape(1, Cout), b2.reshape(1, Cout))
    return jnp.transpose(_leaky_relu(h + y), (0, 2, 1))


# ---------------------------------------------------------------------------
# in-kernel fused 3-tap conv on one row tile
# ---------------------------------------------------------------------------
def _conv3_fused(h_flat, prev_row, next_row, wcat):
    """h_flat (Nb*T, Cp) f32, prev_row/next_row (Nb, Cp) f32 (already boundary-masked),
    wcat (Cp, 3*Cp) = [W_tap0 | W_tap1 | W_tap2].  Returns (Nb, T, Cp) f32.

    One wide MXU matmul produces all three tap outputs; the tap-0 / tap-2 slabs are
    shifted by one row with the halo row injected at the tile edge, then summed."""
    R, Cp = h_flat.shape
    Nb = prev_row.shape[0]
    T = R // Nb
    z = jnp.dot(h_flat, wcat, preferred_element_type=jnp.float32).reshape(Nb, T, 3 * Cp)
    z0, z1, z2 = z[:, :, :Cp], z[:, :, Cp:2 * Cp], z[:, :, 2 * Cp:]
    p0 = jnp.dot(prev_row, wcat[:, :Cp], preferred_element_type=jnp.float32)       # (Nb, Cp)
    n2 = jnp.dot(next_row, wcat[:, 2 * Cp:], preferred_element_type=jnp.float32)   # (Nb, Cp)
    down = jnp.concatenate([p0[:, None, :], z0[:, :T - 1, :]], axis=1)   # z0 shifted +1 row
    up = jnp.concatenate([z2[:, 1:, :], n2[:, None, :]], axis=1)         # z2 shifted -1 row
    return z1 + down + up


# ---------------------------------------------------------------------------
# Pallas kernels (3 passes)
# ---------------------------------------------------------------------------
def _pass1_kernel(*refs, has_pre, T, L):
    """h = pre(x); u = conv1(h); single-pass masked (sum, sumsq) of u."""
    if has_pre:
        x_ref, xp_ref, xn_ref, wpre_ref, wcat_ref, u_ref, st_ref = refs
    else:
        x_ref, xp_ref, xn_ref, wcat_ref, u_ref, st_ref = refs

    i = pl.program_id(0)
    Nb, _, Cin_p = x_ref.shape

    x = x_ref[...]
    xp = xp_ref[...][:, -1, :]     # row i*T - 1 (last row of previous 8-row halo block)
    xn = xn_ref[...][:, 0, :]      # row (i+1)*T (first row of next 8-row halo block)

    if has_pre:
        wpre = wpre_ref[...]

        def pre(a2d):
            return jnp.dot(a2d, wpre, preferred_element_type=jnp.float32)
    else:

        def pre(a2d):
            return a2d.astype(jnp.float32)

    h = pre(x.reshape(Nb * T, Cin_p))                       # (Nb*T, Cout_p)
    hp = jnp.where(i > 0, pre(xp), 0.0)                     # conv zero-pad at l == -1
    hn = jnp.where((i + 1) * T < L, pre(xn), 0.0)           # conv zero-pad / L padding

    u = _conv3_fused(h, hp, hn, wcat_ref[...])              # (Nb, T, Cout_p) f32
    u_ref[...] = u.astype(u_ref.dtype)

    # single-pass BN1 statistics (from the f32 conv result), excluding L-padding rows
    lidx = jax.lax.broadcasted_iota(jnp.int32, (T, 1), 0)
    valid = ((i * T + lidx) < L).astype(jnp.float32)        # (T, 1)
    um = (u * valid).reshape(Nb * T, -1)
    usq = um * u.reshape(Nb * T, -1)
    ssum = jnp.sum(um, axis=0, keepdims=True)
    ssq = jnp.sum(usq, axis=0, keepdims=True)
    st_ref[...] = jnp.concatenate([ssum, ssq], axis=0)[None]


def _pass2_kernel(u_ref, up_ref, un_ref, wcat_ref, s_ref, t_ref, w_ref, st_ref, *, T, L):
    """v = LeakyReLU(BN1(u)); w = conv2(v); single-pass masked (sum, sumsq) of w."""
    i = pl.program_id(0)
    Nb, _, Cp = u_ref.shape
    s = s_ref[...]          # (1, Cp) BN1 scale
    t = t_ref[...]          # (1, Cp) BN1 shift

    def act(a2d):           # fused BN1 affine normalize + LeakyReLU
        z = a2d * s + t
        return jnp.where(z > 0, z, NEG_SLOPE * z)

    lidx = jax.lax.broadcasted_iota(jnp.int32, (T, 1), 0)
    valid = (i * T + lidx) < L

    v = act(u_ref[...].astype(jnp.float32).reshape(Nb * T, Cp)).reshape(Nb, T, Cp)
    v = jnp.where(valid, v, 0.0)                            # conv2 sees 0 beyond real L
    vp = jnp.where(i > 0, act(up_ref[...][:, -1, :].astype(jnp.float32)), 0.0)
    vn = jnp.where((i + 1) * T < L, act(un_ref[...][:, 0, :].astype(jnp.float32)), 0.0)

    w = _conv3_fused(v.reshape(Nb * T, Cp), vp, vn, wcat_ref[...])
    w_ref[...] = w.astype(w_ref.dtype)

    validf = valid.astype(jnp.float32)
    wm = (w * validf).reshape(Nb * T, Cp)
    wsq = wm * w.reshape(Nb * T, Cp)
    st_ref[...] = jnp.concatenate([jnp.sum(wm, axis=0, keepdims=True),
                                   jnp.sum(wsq, axis=0, keepdims=True)], axis=0)[None]


def _pass3_kernel(*refs, has_pre):
    """out = LeakyReLU(pre(x) + BN2(w))  (residual add + final activation)."""
    if has_pre:
        x_ref, w_ref, wpre_ref, s_ref, t_ref, o_ref = refs
    else:
        x_ref, w_ref, s_ref, t_ref, o_ref = refs

    Nb, T, Cin_p = x_ref.shape
    if has_pre:
        h = jnp.dot(x_ref[...].reshape(Nb * T, Cin_p), wpre_ref[...],
                    preferred_element_type=jnp.float32).reshape(Nb, T, -1)
    else:
        h = x_ref[...].astype(jnp.float32)
    y = w_ref[...].astype(jnp.float32) * s_ref[...] + t_ref[...]
    z = h + y
    o_ref[...] = jnp.where(z > 0, z, NEG_SLOPE * z).astype(o_ref.dtype)


# ---------------------------------------------------------------------------
# wrapper
# ---------------------------------------------------------------------------
def _pick_row_tile(L, bytes_per_row, budget_bytes):
    t = budget_bytes // max(bytes_per_row, 1)
    t = max(SUB, (int(t) // SUB) * SUB)
    return int(min(t, 1024, _round_up(L, SUB)))


def _bn_affine(partial_stats, gamma_p, beta_p, count):
    """Finalize single-pass (sum, sumsq) -> per-channel scale/shift for x*scale + shift."""
    s = jnp.sum(partial_stats, axis=0)                      # (2, Cp)
    mean = s[0] / count
    var = jnp.maximum(s[1] / count - mean * mean, 0.0)      # biased variance (torch training)
    scale = gamma_p * jax.lax.rsqrt(var + BN_EPS)
    shift = beta_p - mean * scale
    return (scale.reshape(1, -1).astype(jnp.float32),
            shift.reshape(1, -1).astype(jnp.float32))


def resblock1d(x_ncl, w_pre, w1, w2, g1, b1, g2, b2, *, row_tile=None):
    """ResBlock1D forward.  x_ncl (N, C_in, L); PyTorch weight layouts:
       w_pre (C_out, C_in, 1) or None when in_channel == out_channel (torch Identity),
       w1/w2 (C_out, C_out, 3), g*/b* (C_out,).  Returns (N, C_out, L)."""
    N, Cin, L = x_ncl.shape
    Cout = w1.shape[0]
    has_pre = w_pre is not None
    if not has_pre and Cin != Cout:
        raise ValueError("w_pre=None requires in_channel == out_channel")

    Cout_p = _round_up(Cout, LANE)
    Cin_p = Cout_p if not has_pre else _round_up(Cin, LANE)

    # intermediate activations stored in the input dtype (f32 -> identical, bf16 -> halves
    # the intermediate HBM traffic; BN stats stay f32 inside the kernels)
    interm_dtype = x_ncl.dtype

    # generation-aware VMEM budget (v7x: 64 MiB/TC; v5e/v6e: 128 MiB)
    try:
        vmem_cap = int(pltpu.get_tpu_info().vmem_capacity_bytes)
    except Exception:
        vmem_cap = 64 * 1024 * 1024
    vmem_limit = int(min(vmem_cap // 2, 64 * 1024 * 1024))
    if row_tile is None:
        bytes_per_row = 4 * N * (2 * Cin_p + 12 * Cout_p)   # tiles + temps, double-buffered
        T = _pick_row_tile(L, bytes_per_row, vmem_limit // 3)
    else:
        assert row_tile % SUB == 0
        T = min(int(row_tile), _round_up(L, SUB))
    Lp = _round_up(L, T)
    n_tiles = Lp // T
    Tb = T // SUB
    n_hblk = Lp // SUB

    comp = pltpu.CompilerParams(dimension_semantics=("parallel",),
                                vmem_limit_bytes=vmem_limit)

    # wrapper-side layout: NCL -> channels-last, lane-pad C, pad L to the row tile
    # TODO(synk): if the producer supplies channels-last activations these transposes vanish.
    x_nlc = jnp.transpose(x_ncl, (0, 2, 1))
    x_p = jnp.pad(x_nlc, ((0, 0), (0, Lp - L), (0, Cin_p - Cin)))

    def pad2(m, r, c):
        return jnp.pad(m, ((0, r - m.shape[0]), (0, c - m.shape[1]))).astype(jnp.float32)

    wcat1 = jnp.concatenate([pad2(w1[:, :, k].T, Cout_p, Cout_p) for k in range(3)], axis=1)
    wcat2 = jnp.concatenate([pad2(w2[:, :, k].T, Cout_p, Cout_p) for k in range(3)], axis=1)
    if has_pre:
        wpre_p = pad2(w_pre[:, :, 0].T, Cin_p, Cout_p)

    def padv(v):
        return jnp.pad(v.astype(jnp.float32), (0, Cout_p - Cout))

    g1p, b1p, g2p, b2p = padv(g1), padv(b1), padv(g2), padv(b2)

    # shared BlockSpecs
    def tile_map(i):
        return (0, i, 0)

    def prev_map(i):
        return (0, jnp.maximum(i * Tb - 1, 0), 0)

    def next_map(i):
        return (0, jnp.minimum((i + 1) * Tb, n_hblk - 1), 0)

    def fixed2(i):
        return (0, 0)

    def act_specs(c):
        return [pl.BlockSpec((N, T, c), tile_map),
                pl.BlockSpec((N, SUB, c), prev_map),
                pl.BlockSpec((N, SUB, c), next_map)]

    wcat_spec = pl.BlockSpec((Cout_p, 3 * Cout_p), fixed2)
    wpre_spec = pl.BlockSpec((Cin_p, Cout_p), fixed2)
    vec_spec = pl.BlockSpec((1, Cout_p), fixed2)
    act_out_spec = pl.BlockSpec((N, T, Cout_p), tile_map)
    st_out_spec = pl.BlockSpec((1, 2, Cout_p), lambda i: (i, 0, 0))

    # ---- pass 1: pre + conv1 + BN1 partial stats ----
    p1_specs = act_specs(Cin_p) + ([wpre_spec] if has_pre else []) + [wcat_spec]
    p1_args = [x_p, x_p, x_p] + ([wpre_p] if has_pre else []) + [wcat1]
    u, st1 = pl.pallas_call(
        functools.partial(_pass1_kernel, has_pre=has_pre, T=T, L=L),
        grid=(n_tiles,),
        in_specs=p1_specs,
        out_specs=[act_out_spec, st_out_spec],
        out_shape=[jax.ShapeDtypeStruct((N, Lp, Cout_p), interm_dtype),
                   jax.ShapeDtypeStruct((n_tiles, 2, Cout_p), jnp.float32)],
        compiler_params=comp,
    )(*p1_args)
    scale1, shift1 = _bn_affine(st1, g1p, b1p, float(N * L))

    # ---- pass 2: BN1 + LeakyReLU + conv2 + BN2 partial stats ----
    w_act, st2 = pl.pallas_call(
        functools.partial(_pass2_kernel, T=T, L=L),
        grid=(n_tiles,),
        in_specs=act_specs(Cout_p) + [wcat_spec, vec_spec, vec_spec],
        out_specs=[act_out_spec, st_out_spec],
        out_shape=[jax.ShapeDtypeStruct((N, Lp, Cout_p), interm_dtype),
                   jax.ShapeDtypeStruct((n_tiles, 2, Cout_p), jnp.float32)],
        compiler_params=comp,
    )(u, u, u, wcat2, scale1, shift1)
    scale2, shift2 = _bn_affine(st2, g2p, b2p, float(N * L))

    # ---- pass 3: BN2 + residual add + LeakyReLU ----
    p3_specs = [pl.BlockSpec((N, T, Cin_p), tile_map), act_out_spec] + \
               ([wpre_spec] if has_pre else []) + [vec_spec, vec_spec]
    p3_args = [x_p, w_act] + ([wpre_p] if has_pre else []) + [scale2, shift2]
    out_p = pl.pallas_call(
        functools.partial(_pass3_kernel, has_pre=has_pre),
        grid=(n_tiles,),
        in_specs=p3_specs,
        out_specs=act_out_spec,
        out_shape=jax.ShapeDtypeStruct((N, Lp, Cout_p), x_ncl.dtype),
        compiler_params=comp,
    )(*p3_args)

    # strip padding, back to PyTorch NCL layout
    return jnp.transpose(out_p[:, :L, :Cout], (0, 2, 1))


if __name__ == "__main__":
    # Small deterministic example: batch=2, in_channel=4, out_channel=8, L=16
    N, Cin, Cout, L = 2, 4, 8, 16
    key = jax.random.PRNGKey(0)
    kx, kp, k1, k2, kg1, kb1, kg2, kb2, kx2 = jax.random.split(key, 9)

    x = jax.random.normal(kx, (N, Cin, L), dtype=jnp.float32)
    w_pre = jax.random.normal(kp, (Cout, Cin, 1), dtype=jnp.float32) * 0.3
    w1 = jax.random.normal(k1, (Cout, Cout, 3), dtype=jnp.float32) * 0.2
    w2 = jax.random.normal(k2, (Cout, Cout, 3), dtype=jnp.float32) * 0.2
    g1 = 1.0 + 0.1 * jax.random.normal(kg1, (Cout,), dtype=jnp.float32)
    b1 = 0.1 * jax.random.normal(kb1, (Cout,), dtype=jnp.float32)
    g2 = 1.0 + 0.1 * jax.random.normal(kg2, (Cout,), dtype=jnp.float32)
    b2 = 0.1 * jax.random.normal(kb2, (Cout,), dtype=jnp.float32)

    ref = resblock1d_ref(x, w_pre, w1, w2, g1, b1, g2, b2)

    # default (single-tile) path
    out = jax.block_until_ready(resblock1d(x, w_pre, w1, w2, g1, b1, g2, b2))
    assert out.shape == (N, Cout, L)
    assert jnp.allclose(out, ref, atol=5e-4, rtol=5e-4), "Pallas != reference"

    # multi-tile path (exercises halo blocks + masked partial BN statistics)
    out_t = jax.block_until_ready(resblock1d(x, w_pre, w1, w2, g1, b1, g2, b2, row_tile=8))
    assert jnp.allclose(out_t, ref, atol=5e-4, rtol=5e-4), "tiled Pallas != reference"

    # in_channel == out_channel -> torch.nn.Identity pre (no 1x1 matmul traced)
    x_id = jax.random.normal(kx2, (N, Cout, L), dtype=jnp.float32)
    ref_id = resblock1d_ref(x_id, None, w1, w2, g1, b1, g2, b2)
    out_id = jax.block_until_ready(resblock1d(x_id, None, w1, w2, g1, b1, g2, b2))
    assert out_id.shape == (N, Cout, L)
    assert jnp.allclose(out_id, ref_id, atol=5e-4, rtol=5e-4), "identity-pre Pallas != reference"

    print("KERNEL_OK")
</pallas_src>

<mosaic_0001>
module attributes {stable_mosaic.version = 11 : i64} {
  func.func @_pass1_kernel(%arg0: i32, %arg1: memref<2x16x128xf32, #tpu.memory_space<vmem>>, %arg2: memref<2x8x128xf32, #tpu.memory_space<vmem>>, %arg3: memref<2x8x128xf32, #tpu.memory_space<vmem>>, %arg4: memref<128x128xf32, #tpu.memory_space<vmem>>, %arg5: memref<128x384xf32, #tpu.memory_space<vmem>>, %arg6: memref<2x16x128xf32, #tpu.memory_space<vmem>>, %arg7: memref<1x2x128xf32, #tpu.memory_space<vmem>>) attributes {dimension_semantics = [#tpu.dimension_semantics<parallel>], iteration_bounds = array<i64: 1>, scalar_prefetch = 0 : i64, scratch_operands = 0 : i64, tpu.core_type = #tpu.core_type<tc>, window_params = [{transform_indices = @transform_0, window_bounds = array<i64: 2, 16, 128>}, {transform_indices = @transform_1, window_bounds = array<i64: 2, 8, 128>}, {transform_indices = @transform_2, window_bounds = array<i64: 2, 8, 128>}, {pipeline_mode = #tpu.pipeline_mode<synchronous>, transform_indices = @transform_3, window_bounds = array<i64: 128, 128>}, {pipeline_mode = #tpu.pipeline_mode<synchronous>, transform_indices = @transform_4, window_bounds = array<i64: 128, 384>}, {transform_indices = @transform_5, window_bounds = array<i64: 2, 16, 128>}, {transform_indices = @transform_6, window_bounds = array<i64: 1, 2, 128>}]} {
    %c0 = arith.constant 0 : index
    %c0_0 = arith.constant 0 : index
    %c0_1 = arith.constant 0 : index
    %0 = vector.load %arg1[%c0, %c0_0, %c0_1] : memref<2x16x128xf32, #tpu.memory_space<vmem>>, vector<2x16x128xf32>
    %c0_2 = arith.constant 0 : index
    %c0_3 = arith.constant 0 : index
    %c0_4 = arith.constant 0 : index
    %1 = vector.load %arg2[%c0_2, %c0_3, %c0_4] : memref<2x8x128xf32, #tpu.memory_space<vmem>>, vector<2x8x128xf32>
    %2 = vector.extract_strided_slice %1 {offsets = [0, 7, 0], sizes = [2, 1, 128], strides = [1, 1, 1]} : vector<2x8x128xf32> to vector<2x1x128xf32>
    %3 = vector.shape_cast %2 : vector<2x1x128xf32> to vector<2x128xf32>
    %c0_5 = arith.constant 0 : index
    %c0_6 = arith.constant 0 : index
    %c0_7 = arith.constant 0 : index
    %4 = vector.load %arg3[%c0_5, %c0_6, %c0_7] : memref<2x8x128xf32, #tpu.memory_space<vmem>>, vector<2x8x128xf32>
    %5 = vector.extract_strided_slice %4 {offsets = [0, 0, 0], sizes = [2, 1, 128], strides = [1, 1, 1]} : vector<2x8x128xf32> to vector<2x1x128xf32>
    %6 = vector.shape_cast %5 : vector<2x1x128xf32> to vector<2x128xf32>
    %c0_8 = arith.constant 0 : index
    %c0_9 = arith.constant 0 : index
    %7 = vector.load %arg4[%c0_8, %c0_9] : memref<128x128xf32, #tpu.memory_space<vmem>>, vector<128x128xf32>
    %8 = vector.shape_cast %0 : vector<2x16x128xf32> to vector<32x128xf32>
    %cst = arith.constant dense<0.000000e+00> : vector<32x128xf32>
    %9 = tpu.matmul %8, %7, %cst {dimension_numbers = #tpu.dot_dimension_numbers<[1], [0], [0], [1], [0, 0, 1, 1], [], []>} : vector<32x128xf32>, vector<128x128xf32>, vector<32x128xf32> -> vector<32x128xf32>
    %c0_i32 = arith.constant 0 : i32
    %10 = arith.cmpi sgt, %arg0, %c0_i32 : i32
    %cst_10 = arith.constant dense<0.000000e+00> : vector<2x128xf32>
    %11 = tpu.matmul %3, %7, %cst_10 {dimension_numbers = #tpu.dot_dimension_numbers<[1], [0], [0], [1], [0, 0, 1, 1], [], []>} : vector<2x128xf32>, vector<128x128xf32>, vector<2x128xf32> -> vector<2x128xf32>
    %cst_11 = arith.constant 0.000000e+00 : f32
    %12 = vector.broadcast %cst_11 : f32 to vector<2x128xf32>
    %13 = arith.select %10, %11, %12 : vector<2x128xf32>
    %c1_i32 = arith.constant 1 : i32
    %14 = arith.addi %arg0, %c1_i32 : i32
    %c16_i32 = arith.constant 16 : i32
    %15 = arith.muli %14, %c16_i32 : i32
    %c16_i32_12 = arith.constant 16 : i32
    %16 = arith.cmpi slt, %15, %c16_i32_12 : i32
    %cst_13 = arith.constant dense<0.000000e+00> : vector<2x128xf32>
    %17 = tpu.matmul %6, %7, %cst_13 {dimension_numbers = #tpu.dot_dimension_numbers<[1], [0], [0], [1], [0, 0, 1, 1], [], []>} : vector<2x128xf32>, vector<128x128xf32>, vector<2x128xf32> -> vector<2x128xf32>
    %cst_14 = arith.constant 0.000000e+00 : f32
    %18 = vector.broadcast %cst_14 : f32 to vector<2x128xf32>
    %19 = arith.select %16, %17, %18 : vector<2x128xf32>
    %c0_15 = arith.constant 0 : index
    %c0_16 = arith.constant 0 : index
    %20 = vector.load %arg5[%c0_15, %c0_16] : memref<128x384xf32, #tpu.memory_space<vmem>>, vector<128x384xf32>
    %cst_17 = arith.constant dense<0.000000e+00> : vector<32x384xf32>
    %21 = tpu.matmul %9, %20, %cst_17 {dimension_numbers = #tpu.dot_dimension_numbers<[1], [0], [0], [1], [0, 0, 1, 1], [], []>} : vector<32x128xf32>, vector<128x384xf32>, vector<32x384xf32> -> vector<32x384xf32>
    %22 = vector.shape_cast %21 : vector<32x384xf32> to vector<2x16x384xf32>
    %23 = vector.extract_strided_slice %22 {offsets = [0, 0, 0], sizes = [2, 16, 128], strides = [1, 1, 1]} : vector<2x16x384xf32> to vector<2x16x128xf32>
    %24 = vector.extract_strided_slice %22 {offsets = [0, 0, 128], sizes = [2, 16, 128], strides = [1, 1, 1]} : vector<2x16x384xf32> to vector<2x16x128xf32>
    %25 = vector.extract_strided_slice %22 {offsets = [0, 0, 256], sizes = [2, 16, 128], strides = [1, 1, 1]} : vector<2x16x384xf32> to vector<2x16x128xf32>
    %26 = vector.extract_strided_slice %20 {offsets = [0, 0], sizes = [128, 128], strides = [1, 1]} : vector<128x384xf32> to vector<128x128xf32>
    %cst_18 = arith.constant dense<0.000000e+00> : vector<2x128xf32>
    %27 = tpu.matmul %13, %26, %cst_18 {dimension_numbers = #tpu.dot_dimension_numbers<[1], [0], [0], [1], [0, 0, 1, 1], [], []>} : vector<2x128xf32>, vector<128x128xf32>, vector<2x128xf32> -> vector<2x128xf32>
    %28 = vector.extract_strided_slice %20 {offsets = [0, 256], sizes = [128, 128], strides = [1, 1]} : vector<128x384xf32> to vector<128x128xf32>
    %cst_19 = arith.constant dense<0.000000e+00> : vector<2x128xf32>
    %29 = tpu.matmul %19, %28, %cst_19 {dimension_numbers = #tpu.dot_dimension_numbers<[1], [0], [0], [1], [0, 0, 1, 1], [], []>} : vector<2x128xf32>, vector<128x128xf32>, vector<2x128xf32> -> vector<2x128xf32>
    %30 = vector.shape_cast %27 : vector<2x128xf32> to vector<2x1x128xf32>
    %31 = vector.extract_strided_slice %23 {offsets = [0, 0, 0], sizes = [2, 15, 128], strides = [1, 1, 1]} : vector<2x16x128xf32> to vector<2x15x128xf32>
    %32 = tpu.concatenate %30, %31 in 1 : vector<2x1x128xf32>, vector<2x15x128xf32> -> vector<2x16x128xf32>
    %33 = vector.extract_strided_slice %25 {offsets = [0, 1, 0], sizes = [2, 15, 128], strides = [1, 1, 1]} : vector<2x16x128xf32> to vector<2x15x128xf32>
    %34 = vector.shape_cast %29 : vector<2x128xf32> to vector<2x1x128xf32>
    %35 = tpu.concatenate %33, %34 in 1 : vector<2x15x128xf32>, vector<2x1x128xf32> -> vector<2x16x128xf32>
    %36 = arith.addf %24, %32 : vector<2x16x128xf32>
    %37 = arith.addf %36, %35 : vector<2x16x128xf32>
    %c0_20 = arith.constant 0 : index
    %c0_21 = arith.constant 0 : index
    %c0_22 = arith.constant 0 : index
    %38 = vector.load %arg6[%c0_20, %c0_21, %c0_22] : memref<2x16x128xf32, #tpu.memory_space<vmem>>, vector<2x16x128xf32>
    tpu.vector_store %arg6[%c0_20, %c0_21, %c0_22], %37 {strides = array<i32>} : memref<2x16x128xf32, #tpu.memory_space<vmem>>, vector<2x16x128xf32>,
    %39 = tpu.iota {dimensions = array<i32: 0>} : vector<16x1xi32>
    %c16_i32_23 = arith.constant 16 : i32
    %40 = arith.muli %arg0, %c16_i32_23 : i32
    %41 = vector.broadcast %40 : i32 to vector<16x1xi32>
    %42 = arith.addi %41, %39 : vector<16x1xi32>
    %c16_i32_24 = arith.constant 16 : i32
    %43 = vector.broadcast %c16_i32_24 : i32 to vector<16x1xi32>
    %44 = arith.cmpi slt, %42, %43 : vector<16x1xi32>
    %45 = arith.extui %44 : vector<16x1xi1> to vector<16x1xi32>
    %46 = arith.sitofp %45 : vector<16x1xi32> to vector<16x1xf32>
    %47 = vector.shape_cast %46 : vector<16x1xf32> to vector<1x16x1xf32>
    %48 = vector.broadcast %47 : vector<1x16x1xf32> to vector<2x16x128xf32>
    %49 = arith.mulf %37, %48 : vector<2x16x128xf32>
    %50 = vector.shape_cast %49 : vector<2x16x128xf32> to vector<32x128xf32>
    %51 = vector.shape_cast %37 : vector<2x16x128xf32> to vector<32x128xf32>
    %52 = arith.mulf %50, %51 : vector<32x128xf32>
    %cst_25 = arith.constant dense<0.000000e+00> : vector<128xf32>
    %53 = vector.multi_reduction <add>, %50, %cst_25 [0] : vector<32x128xf32> to vector<128xf32>
    %54 = vector.shape_cast %53 : vector<128xf32> to vector<1x128xf32>
    %cst_26 = arith.constant dense<0.000000e+00> : vector<128xf32>
    %55 = vector.multi_reduction <add>, %52, %cst_26 [0] : vector<32x128xf32> to vector<128xf32>
    %56 = vector.shape_cast %55 : vector<128xf32> to vector<1x128xf32>
    %57 = tpu.concatenate %54, %56 in 0 : vector<1x128xf32>, vector<1x128xf32> -> vector<2x128xf32>
    %58 = vector.shape_cast %57 : vector<2x128xf32> to vector<1x2x128xf32>
    %c0_27 = arith.constant 0 : index
    %c0_28 = arith.constant 0 : index
    %c0_29 = arith.constant 0 : index
    %59 = vector.load %arg7[%c0_27, %c0_28, %c0_29] : memref<1x2x128xf32, #tpu.memory_space<vmem>>, vector<1x2x128xf32>
    tpu.vector_store %arg7[%c0_27, %c0_28, %c0_29], %58 {strides = array<i32>} : memref<1x2x128xf32, #tpu.memory_space<vmem>>, vector<1x2x128xf32>,
    return
  }
  func.func @transform_0(%arg0: i32) -> (i32, i32, i32) {
    %c0_i32 = arith.constant 0 : i32
    %c0_i32_0 = arith.constant 0 : i32
    %c0_i32_1 = arith.constant 0 : i32
    return %c0_i32, %arg0, %c0_i32_0 : i32, i32, i32
  }
  func.func @transform_1(%arg0: i32) -> (i32, i32, i32) {
    %c2_i32 = arith.constant 2 : i32
    %0 = arith.muli %arg0, %c2_i32 : i32
    %c1_i32 = arith.constant 1 : i32
    %1 = arith.subi %0, %c1_i32 : i32
    %c0_i32 = arith.constant 0 : i32
    %2 = arith.maxsi %1, %c0_i32 : i32
    %c0_i32_0 = arith.constant 0 : i32
    %c0_i32_1 = arith.constant 0 : i32
    %c0_i32_2 = arith.constant 0 : i32
    return %c0_i32_0, %2, %c0_i32_1 : i32, i32, i32
  }
  func.func @transform_2(%arg0: i32) -> (i32, i32, i32) {
    %c1_i32 = arith.constant 1 : i32
    %0 = arith.addi %arg0, %c1_i32 : i32
    %c2_i32 = arith.constant 2 : i32
    %1 = arith.muli %0, %c2_i32 : i32
    %c1_i32_0 = arith.constant 1 : i32
    %2 = arith.minsi %1, %c1_i32_0 : i32
    %c0_i32 = arith.constant 0 : i32
    %c0_i32_1 = arith.constant 0 : i32
    %c0_i32_2 = arith.constant 0 : i32
    return %c0_i32, %2, %c0_i32_1 : i32, i32, i32
  }
  func.func @transform_3(%arg0: i32) -> (i32, i32) {
    %c0_i32 = arith.constant 0 : i32
    %c0_i32_0 = arith.constant 0 : i32
    %c0_i32_1 = arith.constant 0 : i32
    return %c0_i32, %c0_i32_0 : i32, i32
  }
  func.func @transform_4(%arg0: i32) -> (i32, i32) {
    %c0_i32 = arith.constant 0 : i32
    %c0_i32_0 = arith.constant 0 : i32
    %c0_i32_1 = arith.constant 0 : i32
    return %c0_i32, %c0_i32_0 : i32, i32
  }
  func.func @transform_5(%arg0: i32) -> (i32, i32, i32) {
    %c0_i32 = arith.constant 0 : i32
    %c0_i32_0 = arith.constant 0 : i32
    %c0_i32_1 = arith.constant 0 : i32
    return %c0_i32, %arg0, %c0_i32_0 : i32, i32, i32
  }
  func.func @transform_6(%arg0: i32) -> (i32, i32, i32) {
    %c0_i32 = arith.constant 0 : i32
    %c0_i32_0 = arith.constant 0 : i32
    %c0_i32_1 = arith.constant 0 : i32
    return %arg0, %c0_i32, %c0_i32_0 : i32, i32, i32
  }
}

</mosaic_0001>

<llo_original>
// kernel: tpu_custom_call.1
$region0: #{tpu_custom_call.1}
  #allocation0 [shape = 'u32[]', space=smem, size = 0x4, offset = 0x4, fixed_abs, tag = 'smem constant byte address 0x4 - core index']
  #allocation1 [shape = 'u32[144,128]{1,0:T(1,128)}', space=vmem, size = 0x12000, scoped, tag = 'internal scratch']
  %s0 = inlined_call_operand.hbm [shape: f32[2,16,128], index: 0, kind: input, shape index: {}]
  %s1 = inlined_call_operand.hbm [shape: f32[2,16,128], index: 1, kind: input, shape index: {}]
  %s2 = inlined_call_operand.hbm [shape: f32[2,16,128], index: 2, kind: input, shape index: {}]
  %s3 = inlined_call_operand.hbm [shape: f32[128,128], index: 3, kind: input, shape index: {}]
  %s4 = inlined_call_operand.hbm [shape: f32[128,384], index: 4, kind: input, shape index: {}]
  %s5 = inlined_call_operand.hbm [shape: f32[2,16,128], index: 5, kind: output, shape index: {0}]
  %s6 = inlined_call_operand.hbm [shape: f32[1,2,128], index: 6, kind: output, shape index: {1}]
  %7 = xla_tuple %s5, %s6
  %s8 = sld [smem:[#allocation0]]
  $region58: #{tpu_custom_call.1} parent=0
    _
  %s10 = ssub.s32 1, %s8
  %s11 = scalar_select 0, %s10, %s8
  $region1: #{tpu_custom_call.1} parent=0
    #allocation2 [shape = 'u8[16384]{0}', space=vmem, size = 0x4000, scoped, tag = 'input window, operand 0, single buffered']
    #allocation3 [shape = 's32[1]{0}', space=sflag, size = 0x4, scoped, tag = 'scoped memory for tpu_custom_call.1']
    #allocation4 [shape = 's32[1]{0}', space=sflag, size = 0x4, scoped, tag = 'scoped memory for tpu_custom_call.1']
    #allocation5 [shape = 'u8[8192]{0}', space=vmem, size = 0x2000, scoped, tag = 'input window, operand 1, single buffered']
    #allocation6 [shape = 's32[1]{0}', space=sflag, size = 0x4, scoped, tag = 'scoped memory for tpu_custom_call.1']
    #allocation7 [shape = 'u8[8192]{0}', space=vmem, size = 0x2000, scoped, tag = 'input window, operand 2, single buffered']
    #allocation8 [shape = 'u8[65536]{0}', space=vmem, size = 0x10000, scoped, tag = 'input window, operand 3, single buffered']
    #allocation9 [shape = 's32[1]{0}', space=sflag, size = 0x4, scoped, tag = 'scoped memory for tpu_custom_call.1']
    #allocation10 [shape = 'u8[196608]{0}', space=vmem, size = 0x30000, scoped, tag = 'input window, operand 4, single buffered']
    #allocation11 [shape = 'u8[16384]{0}', space=vmem, size = 0x4000, scoped, tag = 'output window, operand 0, single buffered']
    #allocation12 [shape = 'u8[1024]{0}', space=vmem, size = 0x400, scoped, tag = 'output window, operand 1, single buffered']
    #allocation13 [shape = 's32[1]{0}', space=sflag, size = 0x4, scoped, tag = 'scoped memory for tpu_custom_call.1']
    %12 = vsyncpa [#allocation3], 0
    %13 = vsyncpa [#allocation6], 0
    %14 = vsyncpa [#allocation9], 0
    %15 = vsyncpa [#allocation4], 0
    %16 = vsyncpa [#allocation13], 0
    // Predicated region
    $region2: #{tpu_custom_call.1} parent=1 // pred_check
      _
    $region3: #{tpu_custom_call.1} parent=1 // pred_check_branch
      %18 = sbr.rel (0) target = $region5
    $region4: #{tpu_custom_call.1} parent=1 // pred_region
      %s20 = ssub.s32 512, 512
      %21 = vsyncadd [#allocation3], %s20
      %s22 = sshll.u32 [#allocation2], 4
      %s23 = int_to_ptr.vmem [resolvable:$true] %s22
      %28 = dma.hbm_to_vmem [thread:$0]  %s0, 512, %s23, [#allocation3], 128, 128, 8
    $region5: #{tpu_custom_call.1} parent=1 // pred_fallthru
      _
    // Predicated region
    $region6: #{tpu_custom_call.1} parent=1 // pred_check
      _
    $region7: #{tpu_custom_call.1} parent=1 // pred_check_branch
      %30 = sbr.rel (0) target = $region9
    $region8: #{tpu_custom_call.1} parent=1 // pred_region
      %s31 = smul.u32 0, 2
      %s32 = ssub.s32 %s31, 1
      %p33 = scmp.gt.s32.totalorder %s32, 0
      %s34 = scalar_select %p33, %s32, 0
      %s36 = ssub.s32 256, 256
      %37 = vsyncadd [#allocation6], %s36
      %s38 = smul.addr %s34, 128
      %s39 = scalar_lea.hbm %s1, %s38
      %s40 = sshll.u32 [#allocation5], 4
      %s41 = int_to_ptr.vmem [resolvable:$true] %s40
      %46 = dma.hbm_to_vmem [thread:$0]  %s39, 256, %s41, [#allocation6], 256, 128, 8
    $region9: #{tpu_custom_call.1} parent=1 // pred_fallthru
      _
    // Predicated region
    $region10: #{tpu_custom_call.1} parent=1 // pred_check
      _
    $region11: #{tpu_custom_call.1} parent=1 // pred_check_branch
      %48 = sbr.rel (0) target = $region13
    $region12: #{tpu_custom_call.1} parent=1 // pred_region
      %s49 = sadd.s32 0, 1
      %s50 = smul.u32 %s49, 2
      %p51 = scmp.lt.s32.totalorder %s50, 1
      %s52 = scalar_select %p51, %s50, 1
      %s54 = ssub.s32 256, 256
      %55 = vsyncadd [#allocation6], %s54
      %s56 = smul.addr %s52, 128
      %s57 = scalar_lea.hbm %s2, %s56
      %s58 = sshll.u32 [#allocation7], 4
      %s59 = int_to_ptr.vmem [resolvable:$true] %s58
      %64 = dma.hbm_to_vmem [thread:$0]  %s57, 256, %s59, [#allocation6], 256, 128, 8
    $region13: #{tpu_custom_call.1} parent=1 // pred_fallthru
      _
    // Predicated region
    $region14: #{tpu_custom_call.1} parent=1 // pred_check
      _
    $region15: #{tpu_custom_call.1} parent=1 // pred_check_branch
      %66 = sbr.rel (0) target = $region17
    $region16: #{tpu_custom_call.1} parent=1 // pred_region
      %s68 = ssub.s32 2048, 2048
      %69 = vsyncadd [#allocation9], %s68
      %s70 = sshll.u32 [#allocation8], 4
      %s71 = int_to_ptr.vmem [resolvable:$true] %s70
      %76 = dma.hbm_to_vmem [thread:$0]  %s3, 2048, %s71, [#allocation9], 128, 128, 8
    $region17: #{tpu_custom_call.1} parent=1 // pred_fallthru
      _
    // Predicated region
    $region18: #{tpu_custom_call.1} parent=1 // pred_check
      _
    $region19: #{tpu_custom_call.1} parent=1 // pred_check_branch
      %78 = sbr.rel (0) target = $region21
    $region20: #{tpu_custom_call.1} parent=1 // pred_region
      %s80 = ssub.s32 6144, 6144
      %81 = vsyncadd [#allocation9], %s80
      %s82 = sshll.u32 [#allocation10], 4
      %s83 = int_to_ptr.vmem [resolvable:$true] %s82
      %88 = dma.hbm_to_vmem [thread:$0]  %s4, 6144, %s83, [#allocation9], 384, 384, 24
    $region21: #{tpu_custom_call.1} parent=1 // pred_fallthru
      _
    // Predicated region
    $region22: #{tpu_custom_call.1} parent=1 // pred_check
      _
    $region23: #{tpu_custom_call.1} parent=1 // pred_check_branch
      %90 = sbr.rel (0) target = $region25
    $region24: #{tpu_custom_call.1} parent=1 // pred_region
      %91 = dma.done [#allocation3], 512
    $region25: #{tpu_custom_call.1} parent=1 // pred_fallthru
      _
    // Predicated region
    $region26: #{tpu_custom_call.1} parent=1 // pred_check
      _
    $region27: #{tpu_custom_call.1} parent=1 // pred_check_branch
      %93 = sbr.rel (0) target = $region29
    $region28: #{tpu_custom_call.1} parent=1 // pred_region
      %94 = dma.done [#allocation6], 256
    $region29: #{tpu_custom_call.1} parent=1 // pred_fallthru
      _
    // Predicated region
    $region30: #{tpu_custom_call.1} parent=1 // pred_check
      _
    $region31: #{tpu_custom_call.1} parent=1 // pred_check_branch
      %96 = sbr.rel (0) target = $region33
    $region32: #{tpu_custom_call.1} parent=1 // pred_region
      %97 = dma.done [#allocation6], 256
    $region33: #{tpu_custom_call.1} parent=1 // pred_fallthru
      _
    // Predicated region
    $region34: #{tpu_custom_call.1} parent=1 // pred_check
      _
    $region35: #{tpu_custom_call.1} parent=1 // pred_check_branch
      %99 = sbr.rel (0) target = $region37
    $region36: #{tpu_custom_call.1} parent=1 // pred_region
      %100 = dma.done [#allocation9], 2048
    $region37: #{tpu_custom_call.1} parent=1 // pred_fallthru
      _
    // Predicated region
    $region38: #{tpu_custom_call.1} parent=1 // pred_check
      _
    $region39: #{tpu_custom_call.1} parent=1 // pred_check_branch
      %102 = sbr.rel (0) target = $region41
    $region40: #{tpu_custom_call.1} parent=1 // pred_region
      %103 = dma.done [#allocation9], 6144
    $region41: #{tpu_custom_call.1} parent=1 // pred_fallthru
      _
    %s104 = smul.u32 0, 2
    %s105 = ssub.s32 %s104, 1
    %p106 = scmp.gt.s32.totalorder %s105, 0
    %s107 = scalar_select %p106, %s105, 0
    %s108 = sadd.s32 0, 1
    %s109 = smul.u32 %s108, 2
    %p110 = scmp.lt.s32.totalorder %s109, 1
    %s111 = scalar_select %p110, %s109, 1
    %v112 = vld [vmem:[#allocation2] sm:$0xff]
    %v113 = vld [vmem:[#allocation2 + $0x8] sm:$0xff]
    %v114 = vld [vmem:[#allocation2 + $0x10] sm:$0xff]
    %v115 = vld [vmem:[#allocation2 + $0x18] sm:$0xff]
    %v116 = vld [vmem:[#allocation5] sm:$0xff]
    %v117 = vld [vmem:[#allocation5 + $0x8] sm:$0xff]
    %v118 = vld [vmem:[#allocation7] sm:$0xff]
    %v119 = vld [vmem:[#allocation7 + $0x8] sm:$0xff]
    %v120 = vld [vmem:[#allocation8] sm:$0xff]
    %v121 = vld [vmem:[#allocation8 + $0x8] sm:$0xff]
    %v122 = vld [vmem:[#allocation8 + $0x10] sm:$0xff]
    %v123 = vld [vmem:[#allocation8 + $0x18] sm:$0xff]
    %v124 = vld [vmem:[#allocation8 + $0x20] sm:$0xff]
    %v125 = vld [vmem:[#allocation8 + $0x28] sm:$0xff]
    %v126 = vld [vmem:[#allocation8 + $0x30] sm:$0xff]
    %v127 = vld [vmem:[#allocation8 + $0x38] sm:$0xff]
    %v128 = vld [vmem:[#allocation8 + $0x40] sm:$0xff]
    %v129 = vld [vmem:[#allocation8 + $0x48] sm:$0xff]
    %v130 = vld [vmem:[#allocation8 + $0x50] sm:$0xff]
    %v131 = vld [vmem:[#allocation8 + $0x58] sm:$0xff]
    %v132 = vld [vmem:[#allocation8 + $0x60] sm:$0xff]
    %v133 = vld [vmem:[#allocation8 + $0x68] sm:$0xff]
    %v134 = vld [vmem:[#allocation8 + $0x70] sm:$0xff]
    %v135 = vld [vmem:[#allocation8 + $0x78] sm:$0xff]
    %136 = vmatprep.subr.mxu0 0.0
    %137 = vmatpush1.msra.mxu0 %v120
    %138 = vmatprep.subr.mxu0 0.0
    %139 = vmatpush1.msra.mxu0 %v121
    %140 = vmatprep.subr.mxu0 0.0
    %141 = vmatpush1.msra.mxu0 %v122
    %142 = vmatprep.subr.mxu0 0.0
    %143 = vmatpush1.msra.mxu0 %v123
    %144 = vmatprep.subr.mxu0 0.0
    %145 = vmatpush1.msra.mxu0 %v124
    %146 = vmatprep.subr.mxu0 0.0
    %147 = vmatpush1.msra.mxu0 %v125
    %148 = vmatprep.subr.mxu0 0.0
    %149 = vmatpush1.msra.mxu0 %v126
    %150 = vmatprep.subr.mxu0 0.0
    %151 = vmatpush1.msra.mxu0 %v127
    %152 = vmatprep.subr.mxu0 0.0
    %153 = vmatpush1.msra.mxu0 %v128
    %154 = vmatprep.subr.mxu0 0.0
    %155 = vmatpush1.msra.mxu0 %v129
    %156 = vmatprep.subr.mxu0 0.0
    %157 = vmatpush1.msra.mxu0 %v130
    %158 = vmatprep.subr.mxu0 0.0
    %159 = vmatpush1.msra.mxu0 %v131
    %160 = vmatprep.subr.mxu0 0.0
    %161 = vmatpush1.msra.mxu0 %v132
    %162 = vmatprep.subr.mxu0 0.0
    %163 = vmatpush1.msra.mxu0 %v133
    %164 = vmatprep.subr.mxu0 0.0
    %165 = vmatpush1.msra.mxu0 %v134
    %166 = vmatprep.subr.mxu0 0.0
    %167 = vmatpush1.msra.mxu0 %v135
    %168 = vmatprep.subr.mxu0 0.0
    %169 = vmatpush1.msra.mxu0 0.0
    %170 = vmatprep.subr.mxu0 0.0
    %171 = vmatpush1.msra.mxu0 0.0
    %172 = vmatprep.subr.mxu0 0.0
    %173 = vmatpush1.msra.mxu0 0.0
    %174 = vmatprep.subr.mxu0 0.0
    %175 = vmatpush1.msra.mxu0 0.0
    %176 = vmatprep.subr.mxu0 0.0
    %177 = vmatpush1.msra.mxu0 0.0
    %178 = vmatprep.subr.mxu0 0.0
    %179 = vmatpush1.msra.mxu0 0.0
    %180 = vmatprep.subr.mxu0 0.0
    %181 = vmatpush1.msra.mxu0 0.0
    %182 = vmatprep.subr.mxu0 0.0
    %183 = vmatpush1.msra.mxu0 0.0
    %184 = vmatprep.subr.mxu0 0.0
    %185 = vmatpush1.msra.mxu0 0.0
    %186 = vmatprep.subr.mxu0 0.0
    %187 = vmatpush1.msra.mxu0 0.0
    %188 = vmatprep.subr.mxu0 0.0
    %189 = vmatpush1.msra.mxu0 0.0
    %190 = vmatprep.subr.mxu0 0.0
    %191 = vmatpush1.msra.mxu0 0.0
    %192 = vmatprep.subr.mxu0 0.0
    %193 = vmatpush1.msra.mxu0 0.0
    %194 = vmatprep.subr.mxu0 0.0
    %195 = vmatpush1.msra.mxu0 0.0
    %196 = vmatprep.subr.mxu0 0.0
    %197 = vmatpush1.msra.mxu0 0.0
    %198 = vmatprep.subr.mxu0 0.0
    %199 = vmatpush1.msra.mxu0 0.0
    %200 = vmatprep.mubr.f32.mxu0 0.0
    %201 = vmatmul.mubr.f32.gmra.mrb[0].mxu0 %v112
    %v202 = vpop.f32.mrb[0].mxu0
    %v203 = vadd.f32 0.0, %v202
    %v204 = vpop.f32.mrb[0].mxu0
    %205 = vmatprep.mubr.f32.mxu0 0.0
    %206 = vmatmul.mubr.f32.gmra.mrb[0].mxu0 %v113
    %v207 = vpop.f32.mrb[0].mxu0
    %v208 = vadd.f32 0.0, %v207
    %v209 = vpop.f32.mrb[0].mxu0
    %210 = vmatprep.mubr.f32.mxu0 0.0
    %211 = vmatmul.mubr.f32.gmra.mrb[0].mxu0 %v114
    %v212 = vpop.f32.mrb[0].mxu0
    %v213 = vadd.f32 0.0, %v212
    %v214 = vpop.f32.mrb[0].mxu0
    %215 = vmatprep.mubr.f32.mxu0 0.0
    %216 = vmatmul.mubr.f32.gmra.mrb[0].mxu0 %v115
    %v217 = vpop.f32.mrb[0].mxu0
    %v218 = vadd.f32 0.0, %v217
    %v219 = vpop.f32.mrb[0].mxu0
    %220 = vdwg.mxu0
    %p221 = scmp.gt.s32.totalorder 0, 0
    %v224 = vrot.slane %v116, 7
    %v225 = vrot.slane %v117, 6
    %vm226 = vcmask 1041409
    %v227 = vsel %vm226, %v225, %v224
    %229 = vmatprep.subr.mxu0 0.0
    %230 = vmatpush1.msra.mxu0 %v120
    %231 = vmatprep.subr.mxu0 0.0
    %232 = vmatpush1.msra.mxu0 %v121
    %233 = vmatprep.subr.mxu0 0.0
    %234 = vmatpush1.msra.mxu0 %v122
    %235 = vmatprep.subr.mxu0 0.0
    %236 = vmatpush1.msra.mxu0 %v123
    %237 = vmatprep.subr.mxu0 0.0
    %238 = vmatpush1.msra.mxu0 %v124
    %239 = vmatprep.subr.mxu0 0.0
    %240 = vmatpush1.msra.mxu0 %v125
    %241 = vmatprep.subr.mxu0 0.0
    %242 = vmatpush1.msra.mxu0 %v126
    %243 = vmatprep.subr.mxu0 0.0
    %244 = vmatpush1.msra.mxu0 %v127
    %245 = vmatprep.subr.mxu0 0.0
    %246 = vmatpush1.msra.mxu0 %v128
    %247 = vmatprep.subr.mxu0 0.0
    %248 = vmatpush1.msra.mxu0 %v129
    %249 = vmatprep.subr.mxu0 0.0
    %250 = vmatpush1.msra.mxu0 %v130
    %251 = vmatprep.subr.mxu0 0.0
    %252 = vmatpush1.msra.mxu0 %v131
    %253 = vmatprep.subr.mxu0 0.0
    %254 = vmatpush1.msra.mxu0 %v132
    %255 = vmatprep.subr.mxu0 0.0
    %256 = vmatpush1.msra.mxu0 %v133
    %257 = vmatprep.subr.mxu0 0.0
    %258 = vmatpush1.msra.mxu0 %v134
    %259 = vmatprep.subr.mxu0 0.0
    %260 = vmatpush1.msra.mxu0 %v135
    %261 = vmatprep.subr.mxu0 0.0
    %262 = vmatpush1.msra.mxu0 0.0
    %263 = vmatprep.subr.mxu0 0.0
    %264 = vmatpush1.msra.mxu0 0.0
    %265 = vmatprep.subr.mxu0 0.0
    %266 = vmatpush1.msra.mxu0 0.0
    %267 = vmatprep.subr.mxu0 0.0
    %268 = vmatpush1.msra.mxu0 0.0
    %269 = vmatprep.subr.mxu0 0.0
    %270 = vmatpush1.msra.mxu0 0.0
    %271 = vmatprep.subr.mxu0 0.0
    %272 = vmatpush1.msra.mxu0 0.0
    %273 = vmatprep.subr.mxu0 0.0
    %274 = vmatpush1.msra.mxu0 0.0
    %275 = vmatprep.subr.mxu0 0.0
    %276 = vmatpush1.msra.mxu0 0.0
    %277 = vmatprep.subr.mxu0 0.0
    %278 = vmatpush1.msra.mxu0 0.0
    %279 = vmatprep.subr.mxu0 0.0
    %280 = vmatpush1.msra.mxu0 0.0
    %281 = vmatprep.subr.mxu0 0.0
    %282 = vmatpush1.msra.mxu0 0.0
    %283 = vmatprep.subr.mxu0 0.0
    %284 = vmatpush1.msra.mxu0 0.0
    %285 = vmatprep.subr.mxu0 0.0
    %286 = vmatpush1.msra.mxu0 0.0
    %287 = vmatprep.subr.mxu0 0.0
    %288 = vmatpush1.msra.mxu0 0.0
    %289 = vmatprep.subr.mxu0 0.0
    %290 = vmatpush1.msra.mxu0 0.0
    %291 = vmatprep.subr.mxu0 0.0
    %292 = vmatpush1.msra.mxu0 0.0
    %293 = vmatprep.mubr.f32.mxu0 0.0
    %294 = vmatmul.mubr.f32.gmra.mrb[0].mxu0 %v227
    %v295 = vpop.f32.mrb[0].mxu0
    %v296 = vadd.f32 0.0, %v295
    %v297 = vpop.f32.mrb[0].mxu0
    %298 = vdwg.mxu0
    %s299 = scalar_select %p221, 1, 0
    %v300 = vstv %s299
    %vm301 = vcmp.eq.s32.totalorder %v300, 1
    %v302 = vsel %vm301, %v296, 0.0
    %s303 = sadd.s32 0, 1
    %s304 = smul.u32 %s303, 16
    %p305 = scmp.lt.s32.totalorder %s304, 16
    %v308 = vrot.slane %v119, 7
    %v309 = vsel %vm226, %v308, %v118
    %311 = vmatprep.subr.mxu0 0.0
    %312 = vmatpush1.msra.mxu0 %v120
    %313 = vmatprep.subr.mxu0 0.0
    %314 = vmatpush1.msra.mxu0 %v121
    %315 = vmatprep.subr.mxu0 0.0
    %316 = vmatpush1.msra.mxu0 %v122
    %317 = vmatprep.subr.mxu0 0.0
    %318 = vmatpush1.msra.mxu0 %v123
    %319 = vmatprep.subr.mxu0 0.0
    %320 = vmatpush1.msra.mxu0 %v124
    %321 = vmatprep.subr.mxu0 0.0
    %322 = vmatpush1.msra.mxu0 %v125
    %323 = vmatprep.subr.mxu0 0.0
    %324 = vmatpush1.msra.mxu0 %v126
    %325 = vmatprep.subr.mxu0 0.0
    %326 = vmatpush1.msra.mxu0 %v127
    %327 = vmatprep.subr.mxu0 0.0
    %328 = vmatpush1.msra.mxu0 %v128
    %329 = vmatprep.subr.mxu0 0.0
    %330 = vmatpush1.msra.mxu0 %v129
    %331 = vmatprep.subr.mxu0 0.0
    %332 = vmatpush1.msra.mxu0 %v130
    %333 = vmatprep.subr.mxu0 0.0
    %334 = vmatpush1.msra.mxu0 %v131
    %335 = vmatprep.subr.mxu0 0.0
    %336 = vmatpush1.msra.mxu0 %v132
    %337 = vmatprep.subr.mxu0 0.0
    %338 = vmatpush1.msra.mxu0 %v133
    %339 = vmatprep.subr.mxu0 0.0
    %340 = vmatpush1.msra.mxu0 %v134
    %341 = vmatprep.subr.mxu0 0.0
    %342 = vmatpush1.msra.mxu0 %v135
    %343 = vmatprep.subr.mxu0 0.0
    %344 = vmatpush1.msra.mxu0 0.0
    %345 = vmatprep.subr.mxu0 0.0
    %346 = vmatpush1.msra.mxu0 0.0
    %347 = vmatprep.subr.mxu0 0.0
    %348 = vmatpush1.msra.mxu0 0.0
    %349 = vmatprep.subr.mxu0 0.0
    %350 = vmatpush1.msra.mxu0 0.0
    %351 = vmatprep.subr.mxu0 0.0
    %352 = vmatpush1.msra.mxu0 0.0
    %353 = vmatprep.subr.mxu0 0.0
    %354 = vmatpush1.msra.mxu0 0.0
    %355 = vmatprep.subr.mxu0 0.0
    %356 = vmatpush1.msra.mxu0 0.0
    %357 = vmatprep.subr.mxu0 0.0
    %358 = vmatpush1.msra.mxu0 0.0
    %359 = vmatprep.subr.mxu0 0.0
    %360 = vmatpush1.msra.mxu0 0.0
    %361 = vmatprep.subr.mxu0 0.0
    %362 = vmatpush1.msra.mxu0 0.0
    %363 = vmatprep.subr.mxu0 0.0
    %364 = vmatpush1.msra.mxu0 0.0
    %365 = vmatprep.subr.mxu0 0.0
    %366 = vmatpush1.msra.mxu0 0.0
    %367 = vmatprep.subr.mxu0 0.0
    %368 = vmatpush1.msra.mxu0 0.0
    %369 = vmatprep.subr.mxu0 0.0
    %370 = vmatpush1.msra.mxu0 0.0
    %371 = vmatprep.subr.mxu0 0.0
    %372 = vmatpush1.msra.mxu0 0.0
    %373 = vmatprep.subr.mxu0 0.0
    %374 = vmatpush1.msra.mxu0 0.0
    %375 = vmatprep.mubr.f32.mxu0 0.0
    %376 = vmatmul.mubr.f32.gmra.mrb[0].mxu0 %v309
    %v377 = vpop.f32.mrb[0].mxu0
    %v378 = vadd.f32 0.0, %v377
    %v379 = vpop.f32.mrb[0].mxu0
    %380 = vdwg.mxu0
    %s381 = scalar_select %p305, 1, 0
    %v382 = vstv %s381
    %vm383 = vcmp.eq.s32.totalorder %v382, 1
    %v384 = vsel %vm383, %v378, 0.0
    %v385 = vld [vmem:[#allocation10] sm:$0xff]
    %v386 = vld [vmem:[#allocation10 + $0x8] sm:$0xff]
    %v387 = vld [vmem:[#allocation10 + $0x10] sm:$0xff]
    %v388 = vld [vmem:[#allocation10 + $0x18] sm:$0xff]
    %v389 = vld [vmem:[#allocation10 + $0x20] sm:$0xff]
    %v390 = vld [vmem:[#allocation10 + $0x28] sm:$0xff]
    %v391 = vld [vmem:[#allocation10 + $0x30] sm:$0xff]
    %v392 = vld [vmem:[#allocation10 + $0x38] sm:$0xff]
    %v393 = vld [vmem:[#allocation10 + $0x40] sm:$0xff]
    %v394 = vld [vmem:[#allocation10 + $0x48] sm:$0xff]
    %v395 = vld [vmem:[#allocation10 + $0x50] sm:$0xff]
    %v396 = vld [vmem:[#allocation10 + $0x58] sm:$0xff]
    %v397 = vld [vmem:[#allocation10 + $0x60] sm:$0xff]
    %v398 = vld [vmem:[#allocation10 + $0x68] sm:$0xff]
    %v399 = vld [vmem:[#allocation10 + $0x70] sm:$0xff]
    %v400 = vld [vmem:[#allocation10 + $0x78] sm:$0xff]
    %v401 = vld [vmem:[#allocation10 + $0x80] sm:$0xff]
    %v402 = vld [vmem:[#allocation10 + $0x88] sm:$0xff]
    %v403 = vld [vmem:[#allocation10 + $0x90] sm:$0xff]
    %v404 = vld [vmem:[#allocation10 + $0x98] sm:$0xff]
    %v405 = vld [vmem:[#allocation10 + $0xa0] sm:$0xff]
    %v406 = vld [vmem:[#allocation10 + $0xa8] sm:$0xff]
    %v407 = vld [vmem:[#allocation10 + $0xb0] sm:$0xff]
    %v408 = vld [vmem:[#allocation10 + $0xb8] sm:$0xff]
    %v409 = vld [vmem:[#allocation10 + $0xc0] sm:$0xff]
    %v410 = vld [vmem:[#allocation10 + $0xc8] sm:$0xff]
    %v411 = vld [vmem:[#allocation10 + $0xd0] sm:$0xff]
    %v412 = vld [vmem:[#allocation10 + $0xd8] sm:$0xff]
    %v413 = vld [vmem:[#allocation10 + $0xe0] sm:$0xff]
    %v414 = vld [vmem:[#allocation10 + $0xe8] sm:$0xff]
    %v415 = vld [vmem:[#allocation10 + $0xf0] sm:$0xff]
    %v416 = vld [vmem:[#allocation10 + $0xf8] sm:$0xff]
    %v417 = vld [vmem:[#allocation10 + $0x100] sm:$0xff]
    %v418 = vld [vmem:[#allocation10 + $0x108] sm:$0xff]
    %v419 = vld [vmem:[#allocation10 + $0x110] sm:$0xff]
    %v420 = vld [vmem:[#allocation10 + $0x118] sm:$0xff]
    %v421 = vld [vmem:[#allocation10 + $0x120] sm:$0xff]
    %v422 = vld [vmem:[#allocation10 + $0x128] sm:$0xff]
    %v423 = vld [vmem:[#allocation10 + $0x130] sm:$0xff]
    %v424 = vld [vmem:[#allocation10 + $0x138] sm:$0xff]
    %v425 = vld [vmem:[#allocation10 + $0x140] sm:$0xff]
    %v426 = vld [vmem:[#allocation10 + $0x148] sm:$0xff]
    %v427 = vld [vmem:[#allocation10 + $0x150] sm:$0xff]
    %v428 = vld [vmem:[#allocation10 + $0x158] sm:$0xff]
    %v429 = vld [vmem:[#allocation10 + $0x160] sm:$0xff]
    %v430 = vld [vmem:[#allocation10 + $0x168] sm:$0xff]
    %v431 = vld [vmem:[#allocation10 + $0x170] sm:$0xff]
    %v432 = vld [vmem:[#allocation10 + $0x178] sm:$0xff]
    %433 = vmatprep.subr.mxu0 %v386
    %434 = vmatpush1.msra.mxu0 %v385
    %435 = vmatprep.subr.mxu0 %v389
    %436 = vmatpush1.msra.mxu0 %v388
    %437 = vmatprep.subr.mxu0 %v392
    %438 = vmatpush1.msra.mxu0 %v391
    %439 = vmatprep.subr.mxu0 %v395
    %440 = vmatpush1.msra.mxu0 %v394
    %441 = vmatprep.subr.mxu0 %v398
    %442 = vmatpush1.msra.mxu0 %v397
    %443 = vmatprep.subr.mxu0 %v401
    %444 = vmatpush1.msra.mxu0 %v400
    %445 = vmatprep.subr.mxu0 %v404
    %446 = vmatpush1.msra.mxu0 %v403
    %447 = vmatprep.subr.mxu0 %v407
    %448 = vmatpush1.msra.mxu0 %v406
    %449 = vmatprep.subr.mxu0 %v410
    %450 = vmatpush1.msra.mxu0 %v409
    %451 = vmatprep.subr.mxu0 %v413
    %452 = vmatpush1.msra.mxu0 %v412
    %453 = vmatprep.subr.mxu0 %v416
    %454 = vmatpush1.msra.mxu0 %v415
    %455 = vmatprep.subr.mxu0 %v419
    %456 = vmatpush1.msra.mxu0 %v418
    %457 = vmatprep.subr.mxu0 %v422
    %458 = vmatpush1.msra.mxu0 %v421
    %459 = vmatprep.subr.mxu0 %v425
    %460 = vmatpush1.msra.mxu0 %v424
    %461 = vmatprep.subr.mxu0 %v428
    %462 = vmatpush1.msra.mxu0 %v427
    %463 = vmatprep.subr.mxu0 %v431
    %464 = vmatpush1.msra.mxu0 %v430
    %465 = vmatprep.subr.mxu0 0.0
    %466 = vmatpush1.msra.mxu0 0.0
    %467 = vmatprep.subr.mxu0 0.0
    %468 = vmatpush1.msra.mxu0 0.0
    %469 = vmatprep.subr.mxu0 0.0
    %470 = vmatpush1.msra.mxu0 0.0
    %471 = vmatprep.subr.mxu0 0.0
    %472 = vmatpush1.msra.mxu0 0.0
    %473 = vmatprep.subr.mxu0 0.0
    %474 = vmatpush1.msra.mxu0 0.0
    %475 = vmatprep.subr.mxu0 0.0
    %476 = vmatpush1.msra.mxu0 0.0
    %477 = vmatprep.subr.mxu0 0.0
    %478 = vmatpush1.msra.mxu0 0.0
    %479 = vmatprep.subr.mxu0 0.0
    %480 = vmatpush1.msra.mxu0 0.0
    %481 = vmatprep.subr.mxu0 0.0
    %482 = vmatpush1.msra.mxu0 0.0
    %483 = vmatprep.subr.mxu0 0.0
    %484 = vmatpush1.msra.mxu0 0.0
    %485 = vmatprep.subr.mxu0 0.0
    %486 = vmatpush1.msra.mxu0 0.0
    %487 = vmatprep.subr.mxu0 0.0
    %488 = vmatpush1.msra.mxu0 0.0
    %489 = vmatprep.subr.mxu0 0.0
    %490 = vmatpush1.msra.mxu0 0.0
    %491 = vmatprep.subr.mxu0 0.0
    %492 = vmatpush1.msra.mxu0 0.0
    %493 = vmatprep.subr.mxu0 0.0
    %494 = vmatpush1.msra.mxu0 0.0
    %495 = vmatprep.subr.mxu0 0.0
    %496 = vmatpush1.msra.mxu0 0.0
    %497 = vmatprep.mubr.f32.mxu0 0.0
    %498 = vmatmul.mubr.f32.gmra.mrb[0].mxu0 %v203
    %v499 = vpop.f32.mrb[0].mxu0
    %v500 = vadd.f32 0.0, %v499
    %v501 = vpop.f32.mrb[0].mxu0
    %v502 = vadd.f32 0.0, %v501
    %503 = vmatprep.mubr.f32.mxu0 0.0
    %504 = vmatmul.mubr.f32.gmra.mrb[0].mxu0 %v208
    %v505 = vpop.f32.mrb[0].mxu0
    %v506 = vadd.f32 0.0, %v505
    %v507 = vpop.f32.mrb[0].mxu0
    %v508 = vadd.f32 0.0, %v507
    %509 = vmatprep.mubr.f32.mxu0 0.0
    %510 = vmatmul.mubr.f32.gmra.mrb[0].mxu0 %v213
    %v511 = vpop.f32.mrb[0].mxu0
    %v512 = vadd.f32 0.0, %v511
    %v513 = vpop.f32.mrb[0].mxu0
    %v514 = vadd.f32 0.0, %v513
    %515 = vmatprep.mubr.f32.mxu0 0.0
    %516 = vmatmul.mubr.f32.gmra.mrb[0].mxu0 %v218
    %v517 = vpop.f32.mrb[0].mxu0
    %v518 = vadd.f32 0.0, %v517
    %v519 = vpop.f32.mrb[0].mxu0
    %v520 = vadd.f32 0.0, %v519
    %521 = vdwg.mxu0
    %522 = vmatprep.subr.mxu0 0.0
    %523 = vmatpush1.msra.mxu0 %v387
    %524 = vmatprep.subr.mxu0 0.0
    %525 = vmatpush1.msra.mxu0 %v390
    %526 = vmatprep.subr.mxu0 0.0
    %527 = vmatpush1.msra.mxu0 %v393
    %528 = vmatprep.subr.mxu0 0.0
    %529 = vmatpush1.msra.mxu0 %v396
    %530 = vmatprep.subr.mxu0 0.0
    %531 = vmatpush1.msra.mxu0 %v399
    %532 = vmatprep.subr.mxu0 0.0
    %533 = vmatpush1.msra.mxu0 %v402
    %534 = vmatprep.subr.mxu0 0.0
    %535 = vmatpush1.msra.mxu0 %v405
    %536 = vmatprep.subr.mxu0 0.0
    %537 = vmatpush1.msra.mxu0 %v408
    %538 = vmatprep.subr.mxu0 0.0
    %539 = vmatpush1.msra.mxu0 %v411
    %540 = vmatprep.subr.mxu0 0.0
    %541 = vmatpush1.msra.mxu0 %v414
    %542 = vmatprep.subr.mxu0 0.0
    %543 = vmatpush1.msra.mxu0 %v417
    %544 = vmatprep.subr.mxu0 0.0
    %545 = vmatpush1.msra.mxu0 %v420
    %546 = vmatprep.subr.mxu0 0.0
    %547 = vmatpush1.msra.mxu0 %v423
    %548 = vmatprep.subr.mxu0 0.0
    %549 = vmatpush1.msra.mxu0 %v426
    %550 = vmatprep.subr.mxu0 0.0
    %551 = vmatpush1.msra.mxu0 %v429
    %552 = vmatprep.subr.mxu0 0.0
    %553 = vmatpush1.msra.mxu0 %v432
    %554 = vmatprep.subr.mxu0 0.0
    %555 = vmatpush1.msra.mxu0 0.0
    %556 = vmatprep.subr.mxu0 0.0
    %557 = vmatpush1.msra.mxu0 0.0
    %558 = vmatprep.subr.mxu0 0.0
    %559 = vmatpush1.msra.mxu0 0.0
    %560 = vmatprep.subr.mxu0 0.0
    %561 = vmatpush1.msra.mxu0 0.0
    %562 = vmatprep.subr.mxu0 0.0
    %563 = vmatpush1.msra.mxu0 0.0
    %564 = vmatprep.subr.mxu0 0.0
    %565 = vmatpush1.msra.mxu0 0.0
    %566 = vmatprep.subr.mxu0 0.0
    %567 = vmatpush1.msra.mxu0 0.0
    %568 = vmatprep.subr.mxu0 0.0
    %569 = vmatpush1.msra.mxu0 0.0
    %570 = vmatprep.subr.mxu0 0.0
    %571 = vmatpush1.msra.mxu0 0.0
    %572 = vmatprep.subr.mxu0 0.0
    %573 = vmatpush1.msra.mxu0 0.0
    %574 = vmatprep.subr.mxu0 0.0
    %575 = vmatpush1.msra.mxu0 0.0
    %576 = vmatprep.subr.mxu0 0.0
    %577 = vmatpush1.msra.mxu0 0.0
    %578 = vmatprep.subr.mxu0 0.0
    %579 = vmatpush1.msra.mxu0 0.0
    %580 = vmatprep.subr.mxu0 0.0
    %581 = vmatpush1.msra.mxu0 0.0
    %582 = vmatprep.subr.mxu0 0.0
    %583 = vmatpush1.msra.mxu0 0.0
    %584 = vmatprep.subr.mxu0 0.0
    %585 = vmatpush1.msra.mxu0 0.0
    %586 = vmatprep.mubr.f32.mxu0 0.0
    %587 = vmatmul.mubr.f32.gmra.mrb[0].mxu0 %v203
    %v588 = vpop.f32.mrb[0].mxu0
    %v589 = vadd.f32 0.0, %v588
    %v590 = vpop.f32.mrb[0].mxu0
    %591 = vmatprep.mubr.f32.mxu0 0.0
    %592 = vmatmul.mubr.f32.gmra.mrb[0].mxu0 %v208
    %v593 = vpop.f32.mrb[0].mxu0
    %v594 = vadd.f32 0.0, %v593
    %v595 = vpop.f32.mrb[0].mxu0
    %596 = vmatprep.mubr.f32.mxu0 0.0
    %597 = vmatmul.mubr.f32.gmra.mrb[0].mxu0 %v213
    %v598 = vpop.f32.mrb[0].mxu0
    %v599 = vadd.f32 0.0, %v598
    %v600 = vpop.f32.mrb[0].mxu0
    %601 = vmatprep.mubr.f32.mxu0 0.0
    %602 = vmatmul.mubr.f32.gmra.mrb[0].mxu0 %v218
    %v603 = vpop.f32.mrb[0].mxu0
    %v604 = vadd.f32 0.0, %v603
    %v605 = vpop.f32.mrb[0].mxu0
    %606 = vdwg.mxu0
    %607 = vmatprep.subr.mxu0 0.0
    %608 = vmatpush1.msra.mxu0 %v385
    %609 = vmatprep.subr.mxu0 0.0
    %610 = vmatpush1.msra.mxu0 %v388
    %611 = vmatprep.subr.mxu0 0.0
    %612 = vmatpush1.msra.mxu0 %v391
    %613 = vmatprep.subr.mxu0 0.0
    %614 = vmatpush1.msra.mxu0 %v394
    %615 = vmatprep.subr.mxu0 0.0
    %616 = vmatpush1.msra.mxu0 %v397
    %617 = vmatprep.subr.mxu0 0.0
    %618 = vmatpush1.msra.mxu0 %v400
    %619 = vmatprep.subr.mxu0 0.0
    %620 = vmatpush1.msra.mxu0 %v403
    %621 = vmatprep.subr.mxu0 0.0
    %622 = vmatpush1.msra.mxu0 %v406
    %623 = vmatprep.subr.mxu0 0.0
    %624 = vmatpush1.msra.mxu0 %v409
    %625 = vmatprep.subr.mxu0 0.0
    %626 = vmatpush1.msra.mxu0 %v412
    %627 = vmatprep.subr.mxu0 0.0
    %628 = vmatpush1.msra.mxu0 %v415
    %629 = vmatprep.subr.mxu0 0.0
    %630 = vmatpush1.msra.mxu0 %v418
    %631 = vmatprep.subr.mxu0 0.0
    %632 = vmatpush1.msra.mxu0 %v421
    %633 = vmatprep.subr.mxu0 0.0
    %634 = vmatpush1.msra.mxu0 %v424
    %635 = vmatprep.subr.mxu0 0.0
    %636 = vmatpush1.msra.mxu0 %v427
    %637 = vmatprep.subr.mxu0 0.0
    %638 = vmatpush1.msra.mxu0 %v430
    %639 = vmatprep.subr.mxu0 0.0
    %640 = vmatpush1.msra.mxu0 0.0
    %641 = vmatprep.subr.mxu0 0.0
    %642 = vmatpush1.msra.mxu0 0.0
    %643 = vmatprep.subr.mxu0 0.0
    %644 = vmatpush1.msra.mxu0 0.0
    %645 = vmatprep.subr.mxu0 0.0
    %646 = vmatpush1.msra.mxu0 0.0
    %647 = vmatprep.subr.mxu0 0.0
    %648 = vmatpush1.msra.mxu0 0.0
    %649 = vmatprep.subr.mxu0 0.0
    %650 = vmatpush1.msra.mxu0 0.0
    %651 = vmatprep.subr.mxu0 0.0
    %652 = vmatpush1.msra.mxu0 0.0
    %653 = vmatprep.subr.mxu0 0.0
    %654 = vmatpush1.msra.mxu0 0.0
    %655 = vmatprep.subr.mxu0 0.0
    %656 = vmatpush1.msra.mxu0 0.0
    %657 = vmatprep.subr.mxu0 0.0
    %658 = vmatpush1.msra.mxu0 0.0
    %659 = vmatprep.subr.mxu0 0.0
    %660 = vmatpush1.msra.mxu0 0.0
    %661 = vmatprep.subr.mxu0 0.0
    %662 = vmatpush1.msra.mxu0 0.0
    %663 = vmatprep.subr.mxu0 0.0
    %664 = vmatpush1.msra.mxu0 0.0
    %665 = vmatprep.subr.mxu0 0.0
    %666 = vmatpush1.msra.mxu0 0.0
    %667 = vmatprep.subr.mxu0 0.0
    %668 = vmatpush1.msra.mxu0 0.0
    %669 = vmatprep.subr.mxu0 0.0
    %670 = vmatpush1.msra.mxu0 0.0
    %671 = vmatprep.mubr.f32.mxu0 0.0
    %672 = vmatmul.mubr.f32.gmra.mrb[0].mxu0 %v302
    %v673 = vpop.f32.mrb[0].mxu0
    %v674 = vadd.f32 0.0, %v673
    %v675 = vpop.f32.mrb[0].mxu0
    %676 = vdwg.mxu0
    %677 = vmatprep.subr.mxu0 0.0
    %678 = vmatpush1.msra.mxu0 %v387
    %679 = vmatprep.subr.mxu0 0.0
    %680 = vmatpush1.msra.mxu0 %v390
    %681 = vmatprep.subr.mxu0 0.0
    %682 = vmatpush1.msra.mxu0 %v393
    %683 = vmatprep.subr.mxu0 0.0
    %684 = vmatpush1.msra.mxu0 %v396
    %685 = vmatprep.subr.mxu0 0.0
    %686 = vmatpush1.msra.mxu0 %v399
    %687 = vmatprep.subr.mxu0 0.0
    %688 = vmatpush1.msra.mxu0 %v402
    %689 = vmatprep.subr.mxu0 0.0
    %690 = vmatpush1.msra.mxu0 %v405
    %691 = vmatprep.subr.mxu0 0.0
    %692 = vmatpush1.msra.mxu0 %v408
    %693 = vmatprep.subr.mxu0 0.0
    %694 = vmatpush1.msra.mxu0 %v411
    %695 = vmatprep.subr.mxu0 0.0
    %696 = vmatpush1.msra.mxu0 %v414
    %697 = vmatprep.subr.mxu0 0.0
    %698 = vmatpush1.msra.mxu0 %v417
    %699 = vmatprep.subr.mxu0 0.0
    %700 = vmatpush1.msra.mxu0 %v420
    %701 = vmatprep.subr.mxu0 0.0
    %702 = vmatpush1.msra.mxu0 %v423
    %703 = vmatprep.subr.mxu0 0.0
    %704 = vmatpush1.msra.mxu0 %v426
    %705 = vmatprep.subr.mxu0 0.0
    %706 = vmatpush1.msra.mxu0 %v429
    %707 = vmatprep.subr.mxu0 0.0
    %708 = vmatpush1.msra.mxu0 %v432
    %709 = vmatprep.subr.mxu0 0.0
    %710 = vmatpush1.msra.mxu0 0.0
    %711 = vmatprep.subr.mxu0 0.0
    %712 = vmatpush1.msra.mxu0 0.0
    %713 = vmatprep.subr.mxu0 0.0
    %714 = vmatpush1.msra.mxu0 0.0
    %715 = vmatprep.subr.mxu0 0.0
    %716 = vmatpush1.msra.mxu0 0.0
    %717 = vmatprep.subr.mxu0 0.0
    %718 = vmatpush1.msra.mxu0 0.0
    %719 = vmatprep.subr.mxu0 0.0
    %720 = vmatpush1.msra.mxu0 0.0
    %721 = vmatprep.subr.mxu0 0.0
    %722 = vmatpush1.msra.mxu0 0.0
    %723 = vmatprep.subr.mxu0 0.0
    %724 = vmatpush1.msra.mxu0 0.0
    %725 = vmatprep.subr.mxu0 0.0
    %726 = vmatpush1.msra.mxu0 0.0
    %727 = vmatprep.subr.mxu0 0.0
    %728 = vmatpush1.msra.mxu0 0.0
    %729 = vmatprep.subr.mxu0 0.0
    %730 = vmatpush1.msra.mxu0 0.0
    %731 = vmatprep.subr.mxu0 0.0
    %732 = vmatpush1.msra.mxu0 0.0
    %733 = vmatprep.subr.mxu0 0.0
    %734 = vmatpush1.msra.mxu0 0.0
    %735 = vmatprep.subr.mxu0 0.0
    %736 = vmatpush1.msra.mxu0 0.0
    %737 = vmatprep.subr.mxu0 0.0
    %738 = vmatpush1.msra.mxu0 0.0
    %739 = vmatprep.subr.mxu0 0.0
    %740 = vmatpush1.msra.mxu0 0.0
    %741 = vmatprep.mubr.f32.mxu0 0.0
    %742 = vmatmul.mubr.f32.gmra.mrb[0].mxu0 %v384
    %v743 = vpop.f32.mrb[0].mxu0
    %v744 = vadd.f32 0.0, %v743
    %v745 = vpop.f32.mrb[0].mxu0
    %746 = vdwg.mxu0
    %v749 = vunpack.c.l.s4 1966171168
    %v750 = vunpack.c.0.s8 %v749
    %v751 = vlaneseq
    %v752 = vshrl.u32 %v751, 7
    %v753 = vsub.s32 %v750, %v752
    %v754 = vrot.slane %v674, %v753
    %v755 = vcombine.high %v754, %v754
    %v757 = vunpack.c.l.s4 1966171168
    %v758 = vunpack.c.0.s8 %v757
    %v759 = vlaneseq
    %v760 = vshrl.u32 %v759, 7
    %v761 = vsub.s32 %v758, %v760
    %v762 = vrot.slane %v754, %v761
    %v764 = vunpack.c.l.s4 1966171168
    %v765 = vunpack.c.0.s8 %v764
    %v766 = vlaneseq
    %v767 = vshrl.u32 %v766, 7
    %v768 = vsub.s32 %v765, %v767
    %v769 = vrot.slane %v755, %v768
    %vm776 = vcmask 1040384
    %v777 = vrot.slane %v500, 7
    %v778 = vrot.slane %v506, 7
    %v779 = vsel %vm776, %v777, %v778
    %v780 = vrot.slane %v512, 7
    %v781 = vrot.slane %v518, 7
    %v782 = vsel %vm776, %v780, %v781
    %v787 = vsel %vm776, %v762, %v777
    %v788 = vsel %vm776, %v769, %v780
    %v791 = vunpack.c.l.s4 1966171168
    %v792 = vunpack.c.0.s8 %v791
    %v793 = vlaneseq
    %v794 = vshrl.u32 %v793, 7
    %v795 = vsub.s32 %v792, %v794
    %v796 = vrot.slane %v744, %v795
    %v797 = vcombine.high %v796, %v796
    %v799 = vunpack.c.l.s4 1966171168
    %v800 = vunpack.c.0.s8 %v799
    %v801 = vlaneseq
    %v802 = vshrl.u32 %v801, 7
    %v803 = vsub.s32 %v800, %v802
    %v804 = vrot.slane %v796, %v803
    %v806 = vunpack.c.l.s4 1966171168
    %v807 = vunpack.c.0.s8 %v806
    %v808 = vlaneseq
    %v809 = vshrl.u32 %v808, 7
    %v810 = vsub.s32 %v807, %v809
    %v811 = vrot.slane %v797, %v810
    %vm816 = vcmask 1046528
    %v817 = vrot.slane %v589, 1
    %v818 = vrot.slane %v594, 1
    %v819 = vsel %vm816, %v817, %v818
    %v820 = vrot.slane %v599, 1
    %v821 = vrot.slane %v604, 1
    %v822 = vsel %vm816, %v820, %v821
    %v827 = vlaneseq
    %v828 = vshrl.u32 %v827, 7
    %v829 = vsub.s32 0, %v828
    %v830 = vrot.slane %v804, %v829
    %v831 = vlaneseq
    %v832 = vshrl.u32 %v831, 7
    %v833 = vsub.s32 0, %v832
    %v834 = vrot.slane %v811, %v833
    %v837 = vsel %vm816, %v818, %v830
    %v838 = vsel %vm816, %v821, %v834
    %v839 = vadd.f32 %v502, %v787
    %v840 = vadd.f32 %v508, %v779
    %v841 = vadd.f32 %v514, %v788
    %v842 = vadd.f32 %v520, %v782
    %v843 = vadd.f32 %v839, %v819
    %v844 = vadd.f32 %v840, %v837
    %v845 = vadd.f32 %v841, %v822
    %v846 = vadd.f32 %v842, %v838
    %847 = vst [vmem:[#allocation11] sm:$0xff] %v843
    %848 = vst [vmem:[#allocation11 + $0x8] sm:$0xff] %v844
    %849 = vst [vmem:[#allocation11 + $0x10] sm:$0xff] %v845
    %850 = vst [vmem:[#allocation11 + $0x18] sm:$0xff] %v846
    %v851 = vlaneseq
    %v852 = vshrl.u32 %v851, 7
    %v853 = vadd.s32 %v852, 8
    %s854 = smul.u32 0, 16
    %v855 = vstv %s854
    %v856 = vadd.s32 %v855, %v852
    %v857 = vadd.s32 %v855, %v853
    %vm858 = vcmp.lt.s32.totalorder %v856, 16
    %vm859 = vcmp.lt.s32.totalorder %v857, 16
    %v860 = vsel %vm858, 1, 0
    %v861 = vsel %vm859, 1, 0
    %v862 = vcvt.s32.f32 %v860
    %v863 = vcvt.s32.f32 %v861
    %v864 = vmul.f32 %v843, %v862
    %v865 = vmul.f32 %v844, %v863
    %v866 = vmul.f32 %v845, %v862
    %v867 = vmul.f32 %v846, %v863
    %v868 = vmul.f32 %v864, %v843
    %v869 = vmul.f32 %v865, %v844
    %v870 = vmul.f32 %v866, %v845
    %v871 = vmul.f32 %v867, %v846
    %v872 = vadd.f32 %v864, %v865
    %v873 = vadd.f32 %v872, %v866
    %v874 = vadd.f32 %v873, %v867
    %v875 = vrot.slane %v874, 4
    %v876 = vadd.f32 %v874, %v875
    %v877 = vrot.slane %v876, 2
    %v878 = vadd.f32 %v876, %v877
    %v879 = vrot.slane %v878, 1
    %v880 = vadd.f32 %v878, %v879
    %v881 = vadd.f32 %v868, %v869
    %v882 = vadd.f32 %v881, %v870
    %v883 = vadd.f32 %v882, %v871
    %v884 = vrot.slane %v883, 4
    %v885 = vadd.f32 %v883, %v884
    %v886 = vrot.slane %v885, 2
    %v887 = vadd.f32 %v885, %v886
    %v888 = vrot.slane %v887, 1
    %v889 = vadd.f32 %v887, %v888
    %v890 = vsel %vm776, %v880, %v889
    %891 = vst [vmem:[#allocation12] sm:$0x3] %v890
    // Predicated region
    $region42: #{tpu_custom_call.1} parent=1 // pred_check
      _
    $region43: #{tpu_custom_call.1} parent=1 // pred_check_branch
      %893 = sbr.rel (0) target = $region45
    $region44: #{tpu_custom_call.1} parent=1 // pred_region
      %s895 = ssub.s32 512, 512
      %896 = vsyncadd [#allocation4], %s895
      %s897 = sshll.u32 [#allocation11], 4
      %s898 = int_to_ptr.vmem [resolvable:$true] %s897
      %903 = dma.vmem_to_hbm [thread:$0]  %s898, 512, %s5, [#allocation4], 128, 128, 8
    $region45: #{tpu_custom_call.1} parent=1 // pred_fallthru
      _
    // Predicated region
    $region46: #{tpu_custom_call.1} parent=1 // pred_check
      _
    $region47: #{tpu_custom_call.1} parent=1 // pred_check_branch
      %905 = sbr.rel (0) target = $region49
    $region48: #{tpu_custom_call.1} parent=1 // pred_region
      %s907 = ssub.s32 32, 32
      %908 = vsyncadd [#allocation13], %s907
      %s910 = sshll.u32 [#allocation12], 4
      %s911 = int_to_ptr.vmem [resolvable:$true] %s910
      %913 = dma.vmem_to_hbm [thread:$0]  %s911, 32, %s6, [#allocation13]
    $region49: #{tpu_custom_call.1} parent=1 // pred_fallthru
      _
    // Predicated region
    $region50: #{tpu_custom_call.1} parent=1 // pred_check
      _
    $region51: #{tpu_custom_call.1} parent=1 // pred_check_branch
      %915 = sbr.rel (0) target = $region53
    $region52: #{tpu_custom_call.1} parent=1 // pred_region
      %916 = dma.done [#allocation4], 512
    $region53: #{tpu_custom_call.1} parent=1 // pred_fallthru
      _
    // Predicated region
    $region54: #{tpu_custom_call.1} parent=1 // pred_check
      _
    $region55: #{tpu_custom_call.1} parent=1 // pred_check_branch
      %918 = sbr.rel (0) target = $region57
    $region56: #{tpu_custom_call.1} parent=1 // pred_region
      %919 = dma.done [#allocation13], 32
    $region57: #{tpu_custom_call.1} parent=1 // pred_fallthru
      _
    %920 = vsyncpa [#allocation3], 1
    %921 = vsyncpa [#allocation6], 1
    %922 = vsyncpa [#allocation9], 1
    %923 = vsyncpa [#allocation4], 1
    %924 = vsyncpa [#allocation13], 1

</llo_original>
